<compile_context>
chip_gen: v6e
topology: v6e:2x2x1
jax: 0.10.0
libtpu: 0.0.40
codegen_flags: <defaults>
</compile_context>

<pallas_src>
import functools

import jax
import jax.numpy as jnp
from jax.experimental import pallas as pl
from jax.experimental.pallas import tpu as pltpu


def _cross_entropy_kernel(logits_ref, tgt_ref, loss_ref, m_ref, l_ref, p_ref,
                          *, num_classes, mask_cols):
    """Grid = (N-tiles [parallel], C-tiles [arbitrary, innermost]).

    Per N-tile state (running row max `m`, running sum-exp `l`, running picked
    target logit `p`) is carried across the C axis in VMEM scratch
    (flash-softmax style).  The per-row loss column is written once, at the
    last C step; all cross-row reduction happens in the JAX wrapper so there
    is no per-step scalar RMW and the N axis stays embarrassingly parallel.
    """
    c = pl.program_id(1)

    @pl.when(c == 0)
    def _():
        m_ref[...] = jnp.full_like(m_ref, -jnp.inf)
        l_ref[...] = jnp.zeros_like(l_ref)
        p_ref[...] = jnp.zeros_like(p_ref)

    x = logits_ref[...].astype(jnp.float32)            # (tile_n, tile_c)
    t = tgt_ref[...]                                   # (tile_n, 1) int32
    tile_n, tile_c = x.shape

    # Global class index of every column in this block.
    col = jax.lax.broadcasted_iota(jnp.int32, (tile_n, tile_c), 1) + c * tile_c
    if mask_cols:
        # Last C block may overrun num_classes; neutralize those columns.
        x = jnp.where(col < num_classes, x, -1e30)

    # Online (running) logsumexp update for this C block.
    m_prev = m_ref[...]
    m_new = jnp.maximum(m_prev, jnp.max(x, axis=-1, keepdims=True))
    shifted = x - m_new                                # reused for exp & pick
    l_ref[...] = (jnp.exp(m_prev - m_new) * l_ref[...]
                  + jnp.sum(jnp.exp(shifted), axis=-1, keepdims=True))
    m_ref[...] = m_new

    # Gather x[i, target[i]] via a one-hot compare (no dynamic gather on TPU).
    # Work on `shifted` so only one full-width temporary stays live, adding
    # the shift back only for the (single) block that contains the hit.
    hit = col == t
    p_ref[...] += (
        jnp.sum(jnp.where(hit, shifted, 0.0), axis=-1, keepdims=True)
        + m_new * jnp.sum(hit.astype(jnp.float32), axis=-1, keepdims=True))

    @pl.when(c == pl.num_programs(1) - 1)
    def _():
        # Per-row NLL of log_softmax: logsumexp(x_i) - x[i, target[i]].
        loss_ref[...] = m_ref[...] + jnp.log(l_ref[...]) - p_ref[...]


def _choose_tiles(n_rows, num_classes, itemsize,
                  block_bytes=2 * 1024 * 1024, max_tile_n=2048):
    """Pick (tile_n, tile_c) so one logits block is ~block_bytes.

    VMEM budget per kernel instance (all generations):
      logits: 2 pipeline buffers x block_bytes              ~4 MiB
      targets / output / 3x scratch: ~7 x tile_n x 512 B    <= ~7 MiB
    => comfortably under the 32 MiB scoped-VMEM limit requested below.
    """
    if num_classes * itemsize * 8 <= block_bytes:
        # Full class dim fits with a healthy number of rows per block.
        tile_c = num_classes
        tile_n = min(max_tile_n, block_bytes // (num_classes * itemsize))
    else:
        # Vocab-scale C: tile the class dim (online logsumexp in-kernel).
        tile_n = 256
        tile_c = max(128, (block_bytes // (tile_n * itemsize)) // 128 * 128)

    # Legalize against the actual array shape / TPU (8, 128) tiling rules.
    if tile_n >= n_rows:
        tile_n = n_rows                    # full-extent block is always legal
    else:
        tile_n = max(8, (tile_n // 8) * 8)
    if tile_c >= num_classes:
        tile_c = num_classes
    return tile_n, tile_c


def cross_entropy(logits, target, *, reduction="mean", tile_n=None, tile_c=None):
    """logits: (N, C) float (f32 or bf16); target: (N,) integer class indices.

    Equivalent to F.nll_loss(F.log_softmax(logits, -1), target, reduction).
    """
    if reduction not in ("mean", "sum", "none"):
        raise ValueError(f"unsupported reduction: {reduction!r}")
    n_rows, num_classes = logits.shape
    assert target.shape == (n_rows,)

    itemsize = jnp.dtype(logits.dtype).itemsize
    auto_tn, auto_tc = _choose_tiles(n_rows, num_classes, itemsize)
    tile_n = auto_tn if tile_n is None else tile_n
    tile_c = auto_tc if tile_c is None else tile_c

    grid = (pl.cdiv(n_rows, tile_n), pl.cdiv(num_classes, tile_c))
    mask_cols = grid[1] * tile_c != num_classes

    # Targets ride as an (N, 1) int32 column: the HBM read per N-tile is one
    # contiguous 4*tile_n-byte transfer (re-fetched only when the N block
    # changes) and is tiny next to the logits slab.
    tgt2d = target.astype(jnp.int32).reshape(n_rows, 1)

    # TODO(synk): PyTorch's ignore_index / per-class weights are not wired up
    # (the module under translation does not use them).
    kernel = functools.partial(_cross_entropy_kernel,
                               num_classes=num_classes, mask_cols=mask_cols)

    per_row = pl.pallas_call(
        kernel,
        out_shape=jax.ShapeDtypeStruct((n_rows, 1), jnp.float32),
        grid_spec=pltpu.PrefetchScalarGridSpec(
            num_scalar_prefetch=0,
            grid=grid,
            in_specs=[
                pl.BlockSpec((tile_n, tile_c), lambda n, c: (n, c)),  # logits
                pl.BlockSpec((tile_n, 1), lambda n, c: (n, 0)),       # targets
            ],
            out_specs=pl.BlockSpec((tile_n, 1), lambda n, c: (n, 0)),  # per-row loss
            scratch_shapes=[pltpu.VMEM((tile_n, 1), jnp.float32)] * 3,
        ),
        compiler_params=pltpu.CompilerParams(
            # N-tiles are independent -> shardable across TensorCores (v7x);
            # C axis is the online-logsumexp reduction, kept innermost.
            dimension_semantics=("parallel", "arbitrary"),
            # Explicit scoped-VMEM budget: raises v5e's 16 MiB default while
            # staying well inside v7x's 64 MiB physical VMEM.
            vmem_limit_bytes=32 * 1024 * 1024,
        ),
    )(logits, tgt2d)

    per_row = per_row.reshape(-1)
    if reduction == "none":
        return per_row
    total = jnp.sum(per_row)
    if reduction == "mean":
        return total / jnp.float32(n_rows)
    return total


if __name__ == "__main__":
    key = jax.random.PRNGKey(0)
    k1, k2, k3, k4 = jax.random.split(key, 4)

    # Case 1: small shapes, single-block path (auto tile selection).
    N, C = 16, 32
    logits = jax.random.normal(k1, (N, C), dtype=jnp.float32)
    target = jax.random.randint(k2, (N,), 0, C, dtype=jnp.int32)
    loss = jax.block_until_ready(cross_entropy(logits, target, reduction="mean"))
    ref = -jnp.mean(jax.nn.log_softmax(logits, axis=-1)[jnp.arange(N), target])
    assert jnp.allclose(loss, ref, atol=1e-5, rtol=1e-5), (loss, ref)

    # Case 2: force a multi-tile grid to exercise the online-logsumexp /
    # C-tiled target pick and the per-row partial outputs.
    N2, C2 = 32, 256
    logits2 = jax.random.normal(k3, (N2, C2), dtype=jnp.float32)
    target2 = jax.random.randint(k4, (N2,), 0, C2, dtype=jnp.int32)
    loss2 = jax.block_until_ready(
        cross_entropy(logits2, target2, reduction="mean", tile_n=8, tile_c=128))
    ref2 = -jnp.mean(jax.nn.log_softmax(logits2, axis=-1)[jnp.arange(N2), target2])
    assert jnp.allclose(loss2, ref2, atol=1e-5, rtol=1e-5), (loss2, ref2)

    # Case 3: 'sum' and 'none' reductions.
    loss_sum = jax.block_until_ready(cross_entropy(logits, target, reduction="sum"))
    ref_sum = -jnp.sum(jax.nn.log_softmax(logits, axis=-1)[jnp.arange(N), target])
    assert jnp.allclose(loss_sum, ref_sum, atol=1e-4, rtol=1e-5), (loss_sum, ref_sum)
    loss_none = jax.block_until_ready(cross_entropy(logits, target, reduction="none"))
    ref_none = -jax.nn.log_softmax(logits, axis=-1)[jnp.arange(N), target]
    assert jnp.allclose(loss_none, ref_none, atol=1e-5, rtol=1e-5)

    print("KERNEL_OK")
</pallas_src>

<mosaic_0001>
module attributes {stable_mosaic.version = 11 : i64} {
  func.func @_cross_entropy_kernel(%arg0: i32, %arg1: i32, %arg2: memref<16x32xf32, #tpu.memory_space<vmem>>, %arg3: memref<16x1xi32, #tpu.memory_space<vmem>>, %arg4: memref<16x1xf32, #tpu.memory_space<vmem>>, %arg5: memref<16x1xf32, #tpu.memory_space<vmem>>, %arg6: memref<16x1xf32, #tpu.memory_space<vmem>>, %arg7: memref<16x1xf32, #tpu.memory_space<vmem>>) attributes {dimension_semantics = [#tpu.dimension_semantics<parallel>, #tpu.dimension_semantics<arbitrary>], iteration_bounds = array<i64: 1, 1>, scalar_prefetch = 0 : i64, scratch_operands = 3 : i64, tpu.core_type = #tpu.core_type<tc>, window_params = [{transform_indices = @transform_0, window_bounds = array<i64: 16, 32>}, {transform_indices = @transform_1, window_bounds = array<i64: 16, 1>}, {transform_indices = @transform_2, window_bounds = array<i64: 16, 1>}]} {
    %c0_i32 = arith.constant 0 : i32
    %0 = arith.cmpi eq, %arg1, %c0_i32 : i32
    %1 = arith.extui %0 : i1 to i32
    %c0_i32_0 = arith.constant 0 : i32
    %2 = arith.cmpi ne, %1, %c0_i32_0 : i32
    scf.if %2 {
      %cst_22 = arith.constant 0xFF800000 : f32
      %43 = vector.broadcast %cst_22 : f32 to vector<16x1xf32>
      %c0_23 = arith.constant 0 : index
      %c0_24 = arith.constant 0 : index
      %44 = vector.load %arg5[%c0_23, %c0_24] : memref<16x1xf32, #tpu.memory_space<vmem>>, vector<16x1xf32>
      tpu.vector_store %arg5[%c0_23, %c0_24], %43 {strides = array<i32>} : memref<16x1xf32, #tpu.memory_space<vmem>>, vector<16x1xf32>,
      %cst_25 = arith.constant 0.000000e+00 : f32
      %45 = vector.broadcast %cst_25 : f32 to vector<16x1xf32>
      %c0_26 = arith.constant 0 : index
      %c0_27 = arith.constant 0 : index
      %46 = vector.load %arg6[%c0_26, %c0_27] : memref<16x1xf32, #tpu.memory_space<vmem>>, vector<16x1xf32>
      tpu.vector_store %arg6[%c0_26, %c0_27], %45 {strides = array<i32>} : memref<16x1xf32, #tpu.memory_space<vmem>>, vector<16x1xf32>,
      %cst_28 = arith.constant 0.000000e+00 : f32
      %47 = vector.broadcast %cst_28 : f32 to vector<16x1xf32>
      %c0_29 = arith.constant 0 : index
      %c0_30 = arith.constant 0 : index
      %48 = vector.load %arg7[%c0_29, %c0_30] : memref<16x1xf32, #tpu.memory_space<vmem>>, vector<16x1xf32>
      tpu.vector_store %arg7[%c0_29, %c0_30], %47 {strides = array<i32>} : memref<16x1xf32, #tpu.memory_space<vmem>>, vector<16x1xf32>,
    } else {
    }
    %c0 = arith.constant 0 : index
    %c0_1 = arith.constant 0 : index
    %3 = vector.load %arg2[%c0, %c0_1] : memref<16x32xf32, #tpu.memory_space<vmem>>, vector<16x32xf32>
    %c0_2 = arith.constant 0 : index
    %c0_3 = arith.constant 0 : index
    %4 = vector.load %arg3[%c0_2, %c0_3] : memref<16x1xi32, #tpu.memory_space<vmem>>, vector<16x1xi32>
    %5 = tpu.iota {dimensions = array<i32: 1>} : vector<16x32xi32>
    %c32_i32 = arith.constant 32 : i32
    %6 = arith.muli %arg1, %c32_i32 : i32
    %7 = vector.broadcast %6 : i32 to vector<16x32xi32>
    %8 = arith.addi %5, %7 : vector<16x32xi32>
    %c0_4 = arith.constant 0 : index
    %c0_5 = arith.constant 0 : index
    %9 = vector.load %arg5[%c0_4, %c0_5] : memref<16x1xf32, #tpu.memory_space<vmem>>, vector<16x1xf32>
    %cst = arith.constant dense<0xFF800000> : vector<16xf32>
    %10 = vector.multi_reduction <maximumf>, %3, %cst [1] : vector<16x32xf32> to vector<16xf32>
    %11 = vector.shape_cast %10 : vector<16xf32> to vector<16x1xf32>
    %12 = arith.maximumf %9, %11 : vector<16x1xf32>
    %13 = vector.broadcast %12 : vector<16x1xf32> to vector<16x32xf32>
    %14 = arith.subf %3, %13 : vector<16x32xf32>
    %15 = arith.subf %9, %12 : vector<16x1xf32>
    %16 = math.exp %15 : vector<16x1xf32>
    %c0_6 = arith.constant 0 : index
    %c0_7 = arith.constant 0 : index
    %17 = vector.load %arg6[%c0_6, %c0_7] : memref<16x1xf32, #tpu.memory_space<vmem>>, vector<16x1xf32>
    %18 = arith.mulf %16, %17 : vector<16x1xf32>
    %19 = math.exp %14 : vector<16x32xf32>
    %cst_8 = arith.constant dense<0.000000e+00> : vector<16xf32>
    %20 = vector.multi_reduction <add>, %19, %cst_8 [1] : vector<16x32xf32> to vector<16xf32>
    %21 = vector.shape_cast %20 : vector<16xf32> to vector<16x1xf32>
    %22 = arith.addf %18, %21 : vector<16x1xf32>
    %c0_9 = arith.constant 0 : index
    %c0_10 = arith.constant 0 : index
    %23 = vector.load %arg6[%c0_9, %c0_10] : memref<16x1xf32, #tpu.memory_space<vmem>>, vector<16x1xf32>
    tpu.vector_store %arg6[%c0_9, %c0_10], %22 {strides = array<i32>} : memref<16x1xf32, #tpu.memory_space<vmem>>, vector<16x1xf32>,
    %c0_11 = arith.constant 0 : index
    %c0_12 = arith.constant 0 : index
    %24 = vector.load %arg5[%c0_11, %c0_12] : memref<16x1xf32, #tpu.memory_space<vmem>>, vector<16x1xf32>
    tpu.vector_store %arg5[%c0_11, %c0_12], %12 {strides = array<i32>} : memref<16x1xf32, #tpu.memory_space<vmem>>, vector<16x1xf32>,
    %25 = vector.broadcast %4 : vector<16x1xi32> to vector<16x32xi32>
    %26 = arith.cmpi eq, %8, %25 : vector<16x32xi32>
    %c0_13 = arith.constant 0 : index
    %c0_14 = arith.constant 0 : index
    %27 = vector.load %arg7[%c0_13, %c0_14] : memref<16x1xf32, #tpu.memory_space<vmem>>, vector<16x1xf32>
    %cst_15 = arith.constant 0.000000e+00 : f32
    %28 = vector.broadcast %cst_15 : f32 to vector<16x32xf32>
    %29 = arith.select %26, %14, %28 : vector<16x32xi1>, vector<16x32xf32>
    %cst_16 = arith.constant dense<0.000000e+00> : vector<16xf32>
    %30 = vector.multi_reduction <add>, %29, %cst_16 [1] : vector<16x32xf32> to vector<16xf32>
    %31 = vector.shape_cast %30 : vector<16xf32> to vector<16x1xf32>
    %32 = arith.extui %26 : vector<16x32xi1> to vector<16x32xi32>
    %33 = arith.sitofp %32 : vector<16x32xi32> to vector<16x32xf32>
    %cst_17 = arith.constant dense<0.000000e+00> : vector<16xf32>
    %34 = vector.multi_reduction <add>, %33, %cst_17 [1] : vector<16x32xf32> to vector<16xf32>
    %35 = vector.shape_cast %34 : vector<16xf32> to vector<16x1xf32>
    %36 = arith.mulf %12, %35 : vector<16x1xf32>
    %37 = arith.addf %31, %36 : vector<16x1xf32>
    %38 = arith.addf %27, %37 : vector<16x1xf32>
    %c0_18 = arith.constant 0 : index
    %c0_19 = arith.constant 0 : index
    %39 = vector.load %arg7[%c0_18, %c0_19] : memref<16x1xf32, #tpu.memory_space<vmem>>, vector<16x1xf32>
    tpu.vector_store %arg7[%c0_18, %c0_19], %38 {strides = array<i32>} : memref<16x1xf32, #tpu.memory_space<vmem>>, vector<16x1xf32>,
    %c0_i32_20 = arith.constant 0 : i32
    %40 = arith.cmpi eq, %arg1, %c0_i32_20 : i32
    %41 = arith.extui %40 : i1 to i32
    %c0_i32_21 = arith.constant 0 : i32
    %42 = arith.cmpi ne, %41, %c0_i32_21 : i32
    scf.if %42 {
      %c0_22 = arith.constant 0 : index
      %c0_23 = arith.constant 0 : index
      %43 = vector.load %arg5[%c0_22, %c0_23] : memref<16x1xf32, #tpu.memory_space<vmem>>, vector<16x1xf32>
      %c0_24 = arith.constant 0 : index
      %c0_25 = arith.constant 0 : index
      %44 = vector.load %arg6[%c0_24, %c0_25] : memref<16x1xf32, #tpu.memory_space<vmem>>, vector<16x1xf32>
      %45 = math.log %44 : vector<16x1xf32>
      %46 = arith.addf %43, %45 : vector<16x1xf32>
      %c0_26 = arith.constant 0 : index
      %c0_27 = arith.constant 0 : index
      %47 = vector.load %arg7[%c0_26, %c0_27] : memref<16x1xf32, #tpu.memory_space<vmem>>, vector<16x1xf32>
      %48 = arith.subf %46, %47 : vector<16x1xf32>
      %c0_28 = arith.constant 0 : index
      %c0_29 = arith.constant 0 : index
      %49 = vector.load %arg4[%c0_28, %c0_29] : memref<16x1xf32, #tpu.memory_space<vmem>>, vector<16x1xf32>
      tpu.vector_store %arg4[%c0_28, %c0_29], %48 {strides = array<i32>} : memref<16x1xf32, #tpu.memory_space<vmem>>, vector<16x1xf32>,
    } else {
    }
    return
  }
  func.func @transform_0(%arg0: i32, %arg1: i32) -> (i32, i32) {
    %c0_i32 = arith.constant 0 : i32
    return %arg0, %arg1 : i32, i32
  }
  func.func @transform_1(%arg0: i32, %arg1: i32) -> (i32, i32) {
    %c0_i32 = arith.constant 0 : i32
    %c0_i32_0 = arith.constant 0 : i32
    return %arg0, %c0_i32 : i32, i32
  }
  func.func @transform_2(%arg0: i32, %arg1: i32) -> (i32, i32) {
    %c0_i32 = arith.constant 0 : i32
    %c0_i32_0 = arith.constant 0 : i32
    return %arg0, %c0_i32 : i32, i32
  }
}

</mosaic_0001>

<llo_original>
// kernel: tpu_custom_call.1
$region0: #{tpu_custom_call.1}
  #allocation0 [shape = 'u32[]', space=smem, size = 0x4, offset = 0x4, fixed_abs, tag = 'smem constant byte address 0x4 - core index']
  #allocation1 [shape = 'u32[144,128]{1,0:T(1,128)}', space=vmem, size = 0x12000, scoped, tag = 'internal scratch']
  #allocation2 [shape = 'f32[16,1]{1,0:T(8,128)}', space=vmem, size = 0x2000, scoped, tag = 'scratch operand']
  #allocation3 [shape = 'f32[16,1]{1,0:T(8,128)}', space=vmem, size = 0x2000, scoped, tag = 'scratch operand']
  #allocation4 [shape = 'f32[16,1]{1,0:T(8,128)}', space=vmem, size = 0x2000, scoped, tag = 'scratch operand']
  %s0 = inlined_call_operand.vmem [shape: f32[16,32], index: 0, kind: input, shape index: {}]
  %s1 = inlined_call_operand.vmem [shape: s32[16,1], index: 1, kind: input, shape index: {}]
  %s2 = inlined_call_operand.vmem [shape: f32[16,1], index: 2, kind: output, shape index: {}]
  %s3 = sld [smem:[#allocation0]]
  $region26: #{tpu_custom_call.1} parent=0
    _
  %s5 = ssub.s32 1, %s3
  %s6 = scalar_select 0, %s5, %s3
  // Predicated region
  $region2: #{tpu_custom_call.1} parent=0 // pred_check
    _
  $region3: #{tpu_custom_call.1} parent=0 // pred_check_branch
    %8 = sbr.rel (0) target = $region5
  $region4: #{tpu_custom_call.1} parent=0 // pred_region
    _
  $region5: #{tpu_custom_call.1} parent=0 // pred_fallthru
    _
  // Predicated region
  $region6: #{tpu_custom_call.1} parent=0 // pred_check
    _
  $region7: #{tpu_custom_call.1} parent=0 // pred_check_branch
    %10 = sbr.rel (0) target = $region9
  $region8: #{tpu_custom_call.1} parent=0 // pred_region
    _
  $region9: #{tpu_custom_call.1} parent=0 // pred_fallthru
    _
  %p11 = scmp.eq.s32.totalorder 0, 0
  // Predicated region
  $region10: #{tpu_custom_call.1} parent=0 // pred_check
    %p12 = pneg %p11
  $region11: #{tpu_custom_call.1} parent=0 // pred_check_branch
    %14 = sbr.rel (%p12) target = $region13
  $region12: #{tpu_custom_call.1} parent=0 // pred_region
    %vm15 = vcmask 7168
    %16 = vst.msk [vmem:[#allocation2] sm:$0xff] %vm15, -inf
    %17 = vst.msk [vmem:[#allocation2 + $0x8] sm:$0xff] %vm15, -inf
    %18 = vst.msk [vmem:[#allocation3] sm:$0xff] %vm15, 0.0
    %19 = vst.msk [vmem:[#allocation3 + $0x8] sm:$0xff] %vm15, 0.0
    %20 = vst.msk [vmem:[#allocation4] sm:$0xff] %vm15, 0.0
    %21 = vst.msk [vmem:[#allocation4 + $0x8] sm:$0xff] %vm15, 0.0
  $region13: #{tpu_custom_call.1} parent=0 // pred_fallthru
    _
  %v22 = vld [vmem:[%s0] sm:$0xff]
  %v23 = vld [vmem:[%s0 + $0x8] sm:$0xff]
  %v24 = vld [vmem:[%s1] sm:$0xff]
  %v25 = vld [vmem:[%s1 + $0x8] sm:$0xff]
  %v26 = vlaneseq
  %v27 = vand.u32 %v26, 127
  %s28 = smul.u32 0, 32
  %v29 = vstv %s28
  %v30 = vadd.s32 %v27, %v29
  %v31 = vld [vmem:[#allocation2] sm:$0xff]
  %v32 = vld [vmem:[#allocation2 + $0x8] sm:$0xff]
  %vm33 = vcmask 261120
  %v34 = vsel %vm33, %v22, -inf
  %35 = vmax.xlane.f32.xlu0 %v34
  %v36 = vpop.xlane.xlu0 %35
  %v37 = vsel %vm33, %v23, -inf
  %38 = vmax.xlane.f32.xlu0 %v37
  %v39 = vpop.xlane.xlu0 %38
  %v40 = vmax.f32 %v31, %v36
  %v41 = vmax.f32 %v32, %v39
  %43 = vset.pattern.permute.xlu0 0
  %44 = vperm.xlu0 %43, %v40
  %v45 = vpop.permute.xlu0 %44
  %48 = vset.pattern.permute.xlu0 0
  %49 = vperm.xlu0 %48, %v41
  %v50 = vpop.permute.xlu0 %49
  %v52 = vsub.f32 %v22, %v45
  %v53 = vsub.f32 %v23, %v50
  %v54 = vsub.f32 %v31, %v40
  %v55 = vsub.f32 %v32, %v41
  %v56 = vmul.f32 %v54, 1.442695
  %v57 = vpow.pop %v56
  %v58 = vmul.f32 %v55, 1.442695
  %v59 = vpow.pop %v58
  %v60 = vld [vmem:[#allocation3] sm:$0xff]
  %v61 = vld [vmem:[#allocation3 + $0x8] sm:$0xff]
  %v62 = vmul.f32 %v57, %v60
  %v63 = vmul.f32 %v59, %v61
  %v64 = vmul.f32 %v52, 1.442695
  %v65 = vpow.pop %v64
  %v66 = vmul.f32 %v53, 1.442695
  %v67 = vpow.pop %v66
  %v68 = vsel %vm33, %v65, 0.0
  %69 = vadd.xlane.f32.xlu0 %v68
  %v70 = vpop.xlane.xlu0 %69
  %v71 = vsel %vm33, %v67, 0.0
  %72 = vadd.xlane.f32.xlu0 %v71
  %v73 = vpop.xlane.xlu0 %72
  %v74 = vadd.f32 %v62, %v70
  %v75 = vadd.f32 %v63, %v73
  %vm76 = vcmask 7168
  %77 = vst.msk [vmem:[#allocation3] sm:$0xff] %vm76, %v74
  %78 = vst.msk [vmem:[#allocation3 + $0x8] sm:$0xff] %vm76, %v75
  %79 = vst.msk [vmem:[#allocation2] sm:$0xff] %vm76, %v40
  %80 = vst.msk [vmem:[#allocation2 + $0x8] sm:$0xff] %vm76, %v41
  %81 = vset.pattern.permute.xlu0 0
  %82 = vperm.xlu0 %81, %v24
  %v83 = vpop.permute.xlu0 %82
  %84 = vset.pattern.permute.xlu0 0
  %85 = vperm.xlu0 %84, %v25
  %v86 = vpop.permute.xlu0 %85
  %vm87 = vcmp.eq.s32.totalorder %v30, %v83
  %vm88 = vcmp.eq.s32.totalorder %v30, %v86
  %v89 = vld [vmem:[#allocation4] sm:$0xff]
  %v90 = vld [vmem:[#allocation4 + $0x8] sm:$0xff]
  %v91 = vsel %vm87, %v52, 0.0
  %v92 = vsel %vm88, %v53, 0.0
  %v93 = vsel %vm33, %v91, 0.0
  %94 = vadd.xlane.f32.xlu0 %v93
  %v95 = vpop.xlane.xlu0 %94
  %v96 = vsel %vm33, %v92, 0.0
  %97 = vadd.xlane.f32.xlu0 %v96
  %v98 = vpop.xlane.xlu0 %97
  %v99 = vsel %vm87, 1, 0
  %v100 = vsel %vm88, 1, 0
  %v101 = vcvt.s32.f32 %v99
  %v102 = vcvt.s32.f32 %v100
  %v103 = vsel %vm33, %v101, 0.0
  %104 = vadd.xlane.f32.xlu0 %v103
  %v105 = vpop.xlane.xlu0 %104
  %v106 = vsel %vm33, %v102, 0.0
  %107 = vadd.xlane.f32.xlu0 %v106
  %v108 = vpop.xlane.xlu0 %107
  %v109 = vmul.f32 %v40, %v105
  %v110 = vmul.f32 %v41, %v108
  %v111 = vadd.f32 %v95, %v109
  %v112 = vadd.f32 %v98, %v110
  %v113 = vadd.f32 %v89, %v111
  %v114 = vadd.f32 %v90, %v112
  %115 = vst.msk [vmem:[#allocation4] sm:$0xff] %vm76, %v113
  %116 = vst.msk [vmem:[#allocation4 + $0x8] sm:$0xff] %vm76, %v114
  // Predicated region
  $region14: #{tpu_custom_call.1} parent=0 // pred_check
    %p117 = pneg %p11
  $region15: #{tpu_custom_call.1} parent=0 // pred_check_branch
    %119 = sbr.rel (%p117) target = $region17
  $region16: #{tpu_custom_call.1} parent=0 // pred_region
    %v120 = vld [vmem:[#allocation2] sm:$0xff]
    %v121 = vld [vmem:[#allocation2 + $0x8] sm:$0xff]
    %v122 = vld [vmem:[#allocation3] sm:$0xff]
    %v123 = vld [vmem:[#allocation3 + $0x8] sm:$0xff]
    %v124 = vlog2.pop %v122
    %v125 = vmul.f32 %v124, 0.6931472
    %v126 = vlog2.pop %v123
    %v127 = vmul.f32 %v126, 0.6931472
    %v128 = vadd.f32 %v120, %v125
    %v129 = vadd.f32 %v121, %v127
    %v130 = vld [vmem:[#allocation4] sm:$0xff]
    %v131 = vld [vmem:[#allocation4 + $0x8] sm:$0xff]
    %v132 = vsub.f32 %v128, %v130
    %v133 = vsub.f32 %v129, %v131
    %134 = vst.msk [vmem:[%s2] sm:$0xff] %vm76, %v132
    %135 = vst.msk [vmem:[%s2 + $0x8] sm:$0xff] %vm76, %v133
  $region17: #{tpu_custom_call.1} parent=0 // pred_fallthru
    _
  // Predicated region
  $region18: #{tpu_custom_call.1} parent=0 // pred_check
    _
  $region19: #{tpu_custom_call.1} parent=0 // pred_check_branch
    %137 = sbr.rel (0) target = $region21
  $region20: #{tpu_custom_call.1} parent=0 // pred_region
    _
  $region21: #{tpu_custom_call.1} parent=0 // pred_fallthru
    _
  // Predicated region
  $region22: #{tpu_custom_call.1} parent=0 // pred_check
    _
  $region23: #{tpu_custom_call.1} parent=0 // pred_check_branch
    %139 = sbr.rel (0) target = $region25
  $region24: #{tpu_custom_call.1} parent=0 // pred_region
    _
  $region25: #{tpu_custom_call.1} parent=0 // pred_fallthru
    _

</llo_original>
